<compile_context>
chip_gen: v7x
topology: tpu7x:2x2x1
jax: 0.10.0
libtpu: 0.0.40
codegen_flags: <defaults>
</compile_context>

<pallas_src>
import math

import jax
import jax.numpy as jnp
from jax import lax
from jax.experimental import pallas as pl
from jax.experimental.pallas import tpu as pltpu

_LOG_2PI = math.log(2.0 * math.pi)


def _round_up(x, m):
    return ((x + m - 1) // m) * m


def _tpu_caps():
    """Generation-aware (VMEM budget, has-2-TensorCores) query with fallbacks."""
    vmem_physical = None
    try:
        vmem_physical = int(pltpu.get_tpu_info().vmem_capacity_bytes)
    except Exception:
        vmem_physical = None
    kind = ""
    try:
        kind = jax.devices()[0].device_kind.lower()
    except Exception:
        pass
    is_v7 = ("v7" in kind) or ("7x" in kind)
    if vmem_physical is None:
        if (not is_v7) and any(t in kind for t in ("v4", "v5", "v6")):
            vmem_physical = 128 << 20          # v4/v5e/v6e: 128 MiB physical VMEM
        else:
            vmem_physical = 64 << 20           # v7x / unknown: be conservative
    # Leave headroom for Mosaic internal scratch + output double buffers:
    #   128 MiB physical -> ~100 MiB budget; 64 MiB physical -> ~50 MiB budget.
    budget = min(int(vmem_physical * 0.78), vmem_physical - (12 << 20))
    budget = max(budget, 32 << 20)
    return int(budget), is_v7


def _choose_tiles(B, L, H, D, wsz, budget, two_cores, tb_max, td_max):
    """Pick (tb, td, single_d).  Prefer a single D tile (resident w2)."""

    def fits(tb_, td_):
        blocks = (tb_ * L * wsz + tb_ * td_ * 4 + L * H * wsz + H * 4
                  + H * td_ * wsz + td_ * 4 + tb_ * 4)
        scratch = tb_ * H * wsz + tb_ * 128 * 4
        return 2 * blocks + scratch + (2 << 20) <= budget

    # Candidate batch tiles, largest first.
    if B <= tb_max:
        if two_cores and B >= 16:
            # v7x: make sure nb >= 2 so the parallel axis feeds both TensorCores.
            tb0 = _round_up(max(8, -(-B // 2)), 8)
        else:
            tb0 = B
    else:
        tb0 = tb_max
    tb_cands = [tb0]
    t = tb0
    while t > 8:
        t = max(8, _round_up(t // 2, 8))
        if t != tb_cands[-1]:
            tb_cands.append(t)

    want_single_d = (td_max is None) or (td_max >= D)
    if want_single_d:
        for tb_ in tb_cands:
            if fits(tb_, D):
                return tb_, D, True            # nd == 1, no D padding needed
    # Tiled-D fallback (w2 streamed per batch tile).
    tb_ = tb_cands[0]
    td_cap = D if td_max is None else min(td_max, D)
    td_ = max(128, (td_cap // 128) * 128)
    while td_ > 128 and not fits(tb_, td_):
        td_ = max(128, ((td_ // 2) // 128) * 128)
    return tb_, td_, False


def _sigma_decoder_logprob_kernel(gauss_ref,                # SMEM (2,): [const, coef]
                                  z_ref, x_ref,             # [tb, L], [tb, td]
                                  w1_ref, b1_ref,           # [L, H], [1, H]
                                  w2_ref, b2_ref,           # [H, td], [1, td]
                                  out_ref,                  # [1, 1, tb] (lane-dense)
                                  h_ref, ssq_ref):          # scratch [tb, H], [tb, 128]
    d = pl.program_id(1)
    nd = pl.num_programs(1)
    tb = h_ref.shape[0]
    td = x_ref.shape[1]

    # ---- once per batch tile: hidden activations + accumulator init --------
    @pl.when(d == 0)
    def _():
        h = jnp.dot(z_ref[...], w1_ref[...],
                    preferred_element_type=jnp.float32) + b1_ref[...]
        # Note: on the bf16 path h is rounded to bf16 between the two matmuls.
        h_ref[...] = jnp.maximum(h, 0.0).astype(h_ref.dtype)
        ssq_ref[...] = jnp.zeros_like(ssq_ref)

    # ---- per D tile: decoder output tile + partial sum of squared errors ---
    outs = jnp.dot(h_ref[...], w2_ref[...],
                   preferred_element_type=jnp.float32) + b2_ref[...]
    diff = x_ref[...] - outs                                    # f32 [tb, td]
    sq = diff * diff
    if td % 128 == 0:
        # Pure full-vreg VPU adds into a [tb, 128] lane-partial accumulator;
        # the single cross-lane reduce is deferred to finalize.
        acc = ssq_ref[...]
        for g in range(td // 128):
            acc = acc + sq[:, g * 128:(g + 1) * 128]
        ssq_ref[...] = acc
    else:
        # Only reachable on the single-D-tile path with D % 128 != 0.
        ssq_ref[:, 0:1] = ssq_ref[:, 0:1] + jnp.sum(sq, axis=-1, keepdims=True)

    # ---- finalize: one XLU reduce + per-row scalar affine + lane-dense store -
    @pl.when(d == nd - 1)
    def _():
        row_ssq = jnp.sum(ssq_ref[...], axis=-1, keepdims=True)   # [tb, 1]
        vals = gauss_ref[0] + gauss_ref[1] * row_ssq              # [tb, 1]
        # sublane->lane transpose via small MXU matmuls (<=128 rows per chunk to
        # bound vreg pressure) so the output store is an unmasked lane-dense vst.
        for c in range(0, tb, 128):
            cw = min(128, tb - c)
            chunk = vals[c:c + cw, :]                             # [cw, 1]
            eye = (lax.broadcasted_iota(jnp.int32, (cw, cw), 0)
                   == lax.broadcasted_iota(jnp.int32, (cw, cw), 1)
                   ).astype(jnp.float32)
            row = jnp.dot(jnp.ones((1, cw), jnp.float32), chunk * eye,
                          preferred_element_type=jnp.float32)     # [1, cw]
            out_ref[:, :, c:c + cw] = row[None]


def prepare_params(params, matmul_dtype=jnp.bfloat16):
    """One-time cast so the per-call hot path pays no extra HBM weight pass."""
    H = params["w1"].shape[1]
    D = params["w2"].shape[1]
    return {
        "w1": jnp.asarray(params["w1"], matmul_dtype),
        "w2": jnp.asarray(params["w2"], matmul_dtype),
        "b1": jnp.asarray(params["b1"], jnp.float32).reshape(1, H),
        "b2": jnp.asarray(params["b2"], jnp.float32).reshape(1, D),
        "log_sigma": jnp.asarray(params["log_sigma"], jnp.float32).reshape(()),
    }


def sigma_decoder_log_prob(z, x, params, *, matmul_dtype=jnp.bfloat16,
                           tb_max=256, td_max=None):
    """Equivalent of SigmaDecoder.forward(z, x, type='log_prob')."""
    B, L = z.shape
    Bx, D = x.shape
    assert Bx == B
    H = params["w1"].shape[1]
    wsz = jnp.dtype(matmul_dtype).itemsize

    budget, two_cores = _tpu_caps()
    tb, td, single_d = _choose_tiles(B, L, H, D, wsz, budget, two_cores,
                                     tb_max, td_max)

    # Weights / biases (identity if caller already used prepare_params()).
    w1 = jnp.asarray(params["w1"], matmul_dtype)
    w2 = jnp.asarray(params["w2"], matmul_dtype)
    b1 = jnp.asarray(params["b1"], jnp.float32).reshape(1, H)
    b2 = jnp.asarray(params["b2"], jnp.float32).reshape(1, D)
    ls = jnp.asarray(params["log_sigma"], jnp.float32).reshape(())
    # Scalar Gaussian terms hoisted out of the kernel (no in-kernel exp).
    gauss = jnp.stack([D * (-0.5 * _LOG_2PI - 0.5 * ls),
                       -0.5 * jnp.exp(-ls)]).astype(jnp.float32)     # (2,)

    zc = jnp.asarray(z, matmul_dtype)
    xc = jnp.asarray(x, jnp.float32)

    # --- batch tiling (parallel grid axis) -----------------------------------
    b_pad = B if tb == B else _round_up(B, tb)
    if b_pad != B:
        zc = jnp.pad(zc, ((0, b_pad - B), (0, 0)))
        xc = jnp.pad(xc, ((0, b_pad - B), (0, 0)))
    nb = b_pad // tb

    # --- D tiling (reduction axis, kept last; single tile on the fast path) --
    if single_d:
        d_pad = D
    else:
        d_pad = _round_up(D, td)
        if d_pad != D:
            xc = jnp.pad(xc, ((0, 0), (0, d_pad - D)))
            w2 = jnp.pad(w2, ((0, 0), (0, d_pad - D)))
            b2 = jnp.pad(b2, ((0, 0), (0, d_pad - D)))
    nd = d_pad // td

    w2_reads = nb if nd > 1 else 1     # w2/b2 re-streamed only on the fallback
    cost = pl.CostEstimate(
        flops=2 * b_pad * (L * H + H * d_pad) + 3 * b_pad * d_pad,
        transcendentals=0,
        bytes_accessed=int(zc.size * wsz + xc.size * 4
                           + w1.size * wsz + b1.size * 4
                           + (w2.size * wsz + b2.size * 4) * w2_reads
                           + b_pad * 4),
    )

    grid_spec = pltpu.PrefetchScalarGridSpec(
        num_scalar_prefetch=0,
        grid=(nb, nd),
        in_specs=[
            pl.BlockSpec(memory_space=pltpu.MemorySpace.SMEM),     # gauss (2,)
            pl.BlockSpec((tb, L), lambda i, d: (i, 0)),            # z   batch tile
            pl.BlockSpec((tb, td), lambda i, d: (i, d)),           # x   batch x D tile
            pl.BlockSpec((L, H), lambda i, d: (0, 0)),             # w1  VMEM-resident
            pl.BlockSpec((1, H), lambda i, d: (0, 0)),             # b1  VMEM-resident
            pl.BlockSpec((H, td), lambda i, d: (0, d)),            # w2  resident when nd==1
            pl.BlockSpec((1, td), lambda i, d: (0, d)),            # b2
        ],
        out_specs=pl.BlockSpec((1, 1, tb), lambda i, d: (i, 0, 0)),  # lane-dense
        scratch_shapes=[
            pltpu.VMEM((tb, H), matmul_dtype),     # hidden activations (per batch tile)
            pltpu.VMEM((tb, 128), jnp.float32),    # lane-partial sum of squared errors
        ],
    )

    out = pl.pallas_call(
        _sigma_decoder_logprob_kernel,
        out_shape=jax.ShapeDtypeStruct((nb, 1, tb), jnp.float32),
        grid_spec=grid_spec,
        compiler_params=pltpu.CompilerParams(
            dimension_semantics=("parallel", "arbitrary"),
            vmem_limit_bytes=int(budget),
        ),
        cost_estimate=cost,
    )(gauss, zc, xc, w1, b1, w2, b2)

    return out.reshape(b_pad)[:B]                # [B], matches torch.sum(..., dim=-1)


def init_params(key, latent_dim, hidden_dim, out_dim):
    k1, k2, k3, k4 = jax.random.split(key, 4)
    return {
        "w1": (jax.random.normal(k1, (latent_dim, hidden_dim), jnp.float32)
               / jnp.sqrt(latent_dim)),
        "b1": jax.random.normal(k2, (1, hidden_dim), jnp.float32) * 0.01,
        "w2": (jax.random.normal(k3, (hidden_dim, out_dim), jnp.float32)
               / jnp.sqrt(hidden_dim)),
        "b2": jax.random.normal(k4, (1, out_dim), jnp.float32) * 0.01,
        # nn.Parameter(torch.full((1,), 0.0)[0]) -> scalar initialized to 0.0
        "log_sigma": jnp.zeros((1,), jnp.float32),
    }


def reference_log_prob(z, x, params):
    hp = jax.lax.Precision.HIGHEST
    h = jnp.maximum(jnp.dot(z, params["w1"], precision=hp) + params["b1"], 0.0)
    outs = jnp.dot(h, params["w2"], precision=hp) + params["b2"]
    ls = jnp.asarray(params["log_sigma"], jnp.float32).reshape(())
    lp = (-0.5 * jnp.log(2.0 * jnp.pi) - 0.5 * ls
          - 0.5 * jnp.exp(-ls) * (x - outs) ** 2)
    return jnp.sum(lp, axis=-1)


if __name__ == "__main__":
    # Small shapes consistent with the module's MLP decoder.
    B, L, H, D = 16, 16, 32, 256

    key = jax.random.PRNGKey(0)
    kp, kz, kx = jax.random.split(key, 3)
    params = init_params(kp, L, H, D)
    z = jax.random.normal(kz, (B, L), jnp.float32)
    x = jax.random.normal(kx, (B, D), jnp.float32)

    ref = reference_log_prob(z, x, params)

    # Default fast path: resident-w2 layout (nd == 1), weights pre-cast once.
    prepped = prepare_params(params, jnp.bfloat16)
    log_p = jax.block_until_ready(sigma_decoder_log_prob(z, x, prepped))
    assert log_p.shape == (B,)
    assert jnp.allclose(log_p, ref, rtol=3e-2, atol=5e-1), (log_p, ref)

    # Tiled-D fallback path (grid = (2 batch tiles, 2 D tiles)).
    log_p_t = jax.block_until_ready(
        sigma_decoder_log_prob(z, x, prepped, tb_max=8, td_max=128))
    assert jnp.allclose(log_p_t, ref, rtol=3e-2, atol=5e-1), (log_p_t, ref)

    # f32 MXU path: close match to the f32 reference.
    log_p_f32 = jax.block_until_ready(
        sigma_decoder_log_prob(z, x, params, matmul_dtype=jnp.float32))
    assert jnp.allclose(log_p_f32, ref, rtol=5e-3, atol=5e-2), (log_p_f32, ref)

    # TODO(synk): `sample` path (torch.normal) not kernelized; only the default
    # forward (type='log_prob') hot path is implemented.
    print("KERNEL_OK")
</pallas_src>

<mosaic_0001>
module attributes {stable_mosaic.version = 11 : i64} {
  func.func @_sigma_decoder_logprob_kernel(%arg0: i32, %arg1: i32, %arg2: memref<2xf32, #tpu.memory_space<smem>>, %arg3: memref<16x16xbf16, #tpu.memory_space<vmem>>, %arg4: memref<16x256xf32, #tpu.memory_space<vmem>>, %arg5: memref<16x32xbf16, #tpu.memory_space<vmem>>, %arg6: memref<1x32xf32, #tpu.memory_space<vmem>>, %arg7: memref<32x256xbf16, #tpu.memory_space<vmem>>, %arg8: memref<1x256xf32, #tpu.memory_space<vmem>>, %arg9: memref<1x1x16xf32, #tpu.memory_space<vmem>>, %arg10: memref<16x32xbf16, #tpu.memory_space<vmem>>, %arg11: memref<16x128xf32, #tpu.memory_space<vmem>>) attributes {dimension_semantics = [#tpu.dimension_semantics<parallel>, #tpu.dimension_semantics<arbitrary>], iteration_bounds = array<i64: 1, 1>, scalar_prefetch = 0 : i64, scratch_operands = 2 : i64, tpu.core_type = #tpu.core_type<tc>, window_params = [{transform_indices = @transform_0, window_bounds = array<i64: 2>}, {transform_indices = @transform_1, window_bounds = array<i64: 16, 16>}, {transform_indices = @transform_2, window_bounds = array<i64: 16, 256>}, {pipeline_mode = #tpu.pipeline_mode<synchronous>, transform_indices = @transform_3, window_bounds = array<i64: 16, 32>}, {pipeline_mode = #tpu.pipeline_mode<synchronous>, transform_indices = @transform_4, window_bounds = array<i64: 1, 32>}, {transform_indices = @transform_5, window_bounds = array<i64: 32, 256>}, {transform_indices = @transform_6, window_bounds = array<i64: 1, 256>}, {transform_indices = @transform_7, window_bounds = array<i64: 1, 1, 16>}]} {
    %c0_i32 = arith.constant 0 : i32
    %0 = arith.cmpi eq, %arg1, %c0_i32 : i32
    %1 = arith.extui %0 : i1 to i32
    %c0_i32_0 = arith.constant 0 : i32
    %2 = arith.cmpi ne, %1, %c0_i32_0 : i32
    scf.if %2 {
      %c0_14 = arith.constant 0 : index
      %c0_15 = arith.constant 0 : index
      %21 = vector.load %arg3[%c0_14, %c0_15] : memref<16x16xbf16, #tpu.memory_space<vmem>>, vector<16x16xbf16>
      %c0_16 = arith.constant 0 : index
      %c0_17 = arith.constant 0 : index
      %22 = vector.load %arg5[%c0_16, %c0_17] : memref<16x32xbf16, #tpu.memory_space<vmem>>, vector<16x32xbf16>
      %cst_18 = arith.constant dense<0.000000e+00> : vector<16x32xf32>
      %23 = tpu.matmul %21, %22, %cst_18 {dimension_numbers = #tpu.dot_dimension_numbers<[1], [0], [0], [1], [0, 0, 1, 1], [], []>} : vector<16x16xbf16>, vector<16x32xbf16>, vector<16x32xf32> -> vector<16x32xf32>
      %c0_19 = arith.constant 0 : index
      %c0_20 = arith.constant 0 : index
      %24 = vector.load %arg6[%c0_19, %c0_20] : memref<1x32xf32, #tpu.memory_space<vmem>>, vector<1x32xf32>
      %25 = vector.broadcast %24 : vector<1x32xf32> to vector<16x32xf32>
      %26 = arith.addf %23, %25 : vector<16x32xf32>
      %cst_21 = arith.constant 0.000000e+00 : f32
      %27 = vector.broadcast %cst_21 : f32 to vector<16x32xf32>
      %28 = arith.maximumf %26, %27 : vector<16x32xf32>
      %29 = arith.truncf %28 : vector<16x32xf32> to vector<16x32xbf16>
      %c0_22 = arith.constant 0 : index
      %c0_23 = arith.constant 0 : index
      %30 = vector.load %arg10[%c0_22, %c0_23] : memref<16x32xbf16, #tpu.memory_space<vmem>>, vector<16x32xbf16>
      tpu.vector_store %arg10[%c0_22, %c0_23], %29 {strides = array<i32>} : memref<16x32xbf16, #tpu.memory_space<vmem>>, vector<16x32xbf16>,
      %cst_24 = arith.constant 0.000000e+00 : f32
      %31 = vector.broadcast %cst_24 : f32 to vector<16x128xf32>
      %c0_25 = arith.constant 0 : index
      %c0_26 = arith.constant 0 : index
      %32 = vector.load %arg11[%c0_25, %c0_26] : memref<16x128xf32, #tpu.memory_space<vmem>>, vector<16x128xf32>
      tpu.vector_store %arg11[%c0_25, %c0_26], %31 {strides = array<i32>} : memref<16x128xf32, #tpu.memory_space<vmem>>, vector<16x128xf32>,
    } else {
    }
    %c0 = arith.constant 0 : index
    %c0_1 = arith.constant 0 : index
    %3 = vector.load %arg10[%c0, %c0_1] : memref<16x32xbf16, #tpu.memory_space<vmem>>, vector<16x32xbf16>
    %c0_2 = arith.constant 0 : index
    %c0_3 = arith.constant 0 : index
    %4 = vector.load %arg7[%c0_2, %c0_3] : memref<32x256xbf16, #tpu.memory_space<vmem>>, vector<32x256xbf16>
    %cst = arith.constant dense<0.000000e+00> : vector<16x256xf32>
    %5 = tpu.matmul %3, %4, %cst {dimension_numbers = #tpu.dot_dimension_numbers<[1], [0], [0], [1], [0, 0, 1, 1], [], []>} : vector<16x32xbf16>, vector<32x256xbf16>, vector<16x256xf32> -> vector<16x256xf32>
    %c0_4 = arith.constant 0 : index
    %c0_5 = arith.constant 0 : index
    %6 = vector.load %arg8[%c0_4, %c0_5] : memref<1x256xf32, #tpu.memory_space<vmem>>, vector<1x256xf32>
    %7 = vector.broadcast %6 : vector<1x256xf32> to vector<16x256xf32>
    %8 = arith.addf %5, %7 : vector<16x256xf32>
    %c0_6 = arith.constant 0 : index
    %c0_7 = arith.constant 0 : index
    %9 = vector.load %arg4[%c0_6, %c0_7] : memref<16x256xf32, #tpu.memory_space<vmem>>, vector<16x256xf32>
    %10 = arith.subf %9, %8 : vector<16x256xf32>
    %11 = arith.mulf %10, %10 : vector<16x256xf32>
    %c0_8 = arith.constant 0 : index
    %c0_9 = arith.constant 0 : index
    %12 = vector.load %arg11[%c0_8, %c0_9] : memref<16x128xf32, #tpu.memory_space<vmem>>, vector<16x128xf32>
    %13 = vector.extract_strided_slice %11 {offsets = [0, 0], sizes = [16, 128], strides = [1, 1]} : vector<16x256xf32> to vector<16x128xf32>
    %14 = arith.addf %12, %13 : vector<16x128xf32>
    %15 = vector.extract_strided_slice %11 {offsets = [0, 128], sizes = [16, 128], strides = [1, 1]} : vector<16x256xf32> to vector<16x128xf32>
    %16 = arith.addf %14, %15 : vector<16x128xf32>
    %c0_10 = arith.constant 0 : index
    %c0_11 = arith.constant 0 : index
    %17 = vector.load %arg11[%c0_10, %c0_11] : memref<16x128xf32, #tpu.memory_space<vmem>>, vector<16x128xf32>
    tpu.vector_store %arg11[%c0_10, %c0_11], %16 {strides = array<i32>} : memref<16x128xf32, #tpu.memory_space<vmem>>, vector<16x128xf32>,
    %c0_i32_12 = arith.constant 0 : i32
    %18 = arith.cmpi eq, %arg1, %c0_i32_12 : i32
    %19 = arith.extui %18 : i1 to i32
    %c0_i32_13 = arith.constant 0 : i32
    %20 = arith.cmpi ne, %19, %c0_i32_13 : i32
    scf.if %20 {
      %c0_14 = arith.constant 0 : index
      %c0_15 = arith.constant 0 : index
      %21 = vector.load %arg11[%c0_14, %c0_15] : memref<16x128xf32, #tpu.memory_space<vmem>>, vector<16x128xf32>
      %cst_16 = arith.constant dense<0.000000e+00> : vector<16xf32>
      %22 = vector.multi_reduction <add>, %21, %cst_16 [1] : vector<16x128xf32> to vector<16xf32>
      %23 = vector.shape_cast %22 : vector<16xf32> to vector<16x1xf32>
      %c0_17 = arith.constant 0 : index
      %24 = memref.load %arg2[%c0_17] : memref<2xf32, #tpu.memory_space<smem>>
      %c1 = arith.constant 1 : index
      %25 = memref.load %arg2[%c1] : memref<2xf32, #tpu.memory_space<smem>>
      %26 = vector.broadcast %25 : f32 to vector<16x1xf32>
      %27 = arith.mulf %26, %23 : vector<16x1xf32>
      %28 = vector.broadcast %24 : f32 to vector<16x1xf32>
      %29 = arith.addf %28, %27 : vector<16x1xf32>
      %30 = tpu.iota {dimensions = array<i32: 0>} : vector<16x16xi32>
      %31 = tpu.iota {dimensions = array<i32: 1>} : vector<16x16xi32>
      %32 = arith.cmpi eq, %30, %31 : vector<16x16xi32>
      %33 = arith.extui %32 : vector<16x16xi1> to vector<16x16xi32>
      %34 = arith.sitofp %33 : vector<16x16xi32> to vector<16x16xf32>
      %cst_18 = arith.constant 1.000000e+00 : f32
      %35 = vector.broadcast %cst_18 : f32 to vector<1x16xf32>
      %36 = vector.broadcast %29 : vector<16x1xf32> to vector<16x16xf32>
      %37 = arith.mulf %36, %34 : vector<16x16xf32>
      %cst_19 = arith.constant dense<0.000000e+00> : vector<1x16xf32>
      %38 = tpu.matmul %35, %37, %cst_19 {dimension_numbers = #tpu.dot_dimension_numbers<[1], [0], [0], [1], [0, 0, 1, 1], [], []>} : vector<1x16xf32>, vector<16x16xf32>, vector<1x16xf32> -> vector<1x16xf32>
      %39 = vector.shape_cast %38 : vector<1x16xf32> to vector<1x1x16xf32>
      %c0_20 = arith.constant 0 : index
      %c0_21 = arith.constant 0 : index
      %c0_22 = arith.constant 0 : index
      %40 = vector.load %arg9[%c0_20, %c0_21, %c0_22] : memref<1x1x16xf32, #tpu.memory_space<vmem>>, vector<1x1x16xf32>
      tpu.vector_store %arg9[%c0_20, %c0_21, %c0_22], %39 {strides = array<i32>} : memref<1x1x16xf32, #tpu.memory_space<vmem>>, vector<1x1x16xf32>,
    } else {
    }
    return
  }
  func.func @transform_0(%arg0: i32, %arg1: i32) -> i32 {
    %c0_i32 = arith.constant 0 : i32
    %c0_i32_0 = arith.constant 0 : i32
    return %c0_i32 : i32
  }
  func.func @transform_1(%arg0: i32, %arg1: i32) -> (i32, i32) {
    %c0_i32 = arith.constant 0 : i32
    %c0_i32_0 = arith.constant 0 : i32
    return %arg0, %c0_i32 : i32, i32
  }
  func.func @transform_2(%arg0: i32, %arg1: i32) -> (i32, i32) {
    %c0_i32 = arith.constant 0 : i32
    return %arg0, %arg1 : i32, i32
  }
  func.func @transform_3(%arg0: i32, %arg1: i32) -> (i32, i32) {
    %c0_i32 = arith.constant 0 : i32
    %c0_i32_0 = arith.constant 0 : i32
    %c0_i32_1 = arith.constant 0 : i32
    return %c0_i32, %c0_i32_0 : i32, i32
  }
  func.func @transform_4(%arg0: i32, %arg1: i32) -> (i32, i32) {
    %c0_i32 = arith.constant 0 : i32
    %c0_i32_0 = arith.constant 0 : i32
    %c0_i32_1 = arith.constant 0 : i32
    return %c0_i32, %c0_i32_0 : i32, i32
  }
  func.func @transform_5(%arg0: i32, %arg1: i32) -> (i32, i32) {
    %c0_i32 = arith.constant 0 : i32
    %c0_i32_0 = arith.constant 0 : i32
    return %c0_i32, %arg1 : i32, i32
  }
  func.func @transform_6(%arg0: i32, %arg1: i32) -> (i32, i32) {
    %c0_i32 = arith.constant 0 : i32
    %c0_i32_0 = arith.constant 0 : i32
    return %c0_i32, %arg1 : i32, i32
  }
  func.func @transform_7(%arg0: i32, %arg1: i32) -> (i32, i32, i32) {
    %c0_i32 = arith.constant 0 : i32
    %c0_i32_0 = arith.constant 0 : i32
    %c0_i32_1 = arith.constant 0 : i32
    return %arg0, %c0_i32, %c0_i32_0 : i32, i32, i32
  }
}

</mosaic_0001>

<llo_original>
// kernel: tpu_custom_call.1
$region0: #{tpu_custom_call.1}
  #allocation0 [shape = 'u32[]', space=smem, size = 0x4, offset = 0x4, fixed_abs, tag = 'smem constant byte address 0x4 - core index']
  #allocation1 [shape = 'u32[144,128]{1,0:T(1,128)}', space=vmem, size = 0x12000, scoped, tag = 'internal scratch']
  #allocation2 [shape = 'bf16[16,32]{1,0:T(16,128)(2,1)}', space=vmem, size = 0x1000, scoped, tag = 'scratch operand']
  #allocation3 [shape = 'f32[16,128]{1,0:T(8,128)}', space=vmem, size = 0x2000, scoped, tag = 'scratch operand']
  %s0 = inlined_call_operand.hbm [shape: f32[2], index: 0, kind: input, shape index: {}]
  %s1 = inlined_call_operand.hbm [shape: bf16[16,16], index: 1, kind: input, shape index: {}]
  %s2 = inlined_call_operand.hbm [shape: f32[16,256], index: 2, kind: input, shape index: {}]
  %s3 = inlined_call_operand.vmem [shape: bf16[16,32], index: 3, kind: input, shape index: {}]
  %s4 = inlined_call_operand.vmem [shape: f32[1,32], index: 4, kind: input, shape index: {}]
  %s5 = inlined_call_operand.hbm [shape: bf16[32,256], index: 5, kind: input, shape index: {}]
  %s6 = inlined_call_operand.vmem [shape: f32[1,256], index: 6, kind: input, shape index: {}]
  %s7 = inlined_call_operand.hbm [shape: f32[1,1,16], index: 7, kind: output, shape index: {}]
  %s8 = sld [smem:[#allocation0]]
  $region62: #{tpu_custom_call.1} parent=0
    _
  %s10 = ssub.s32 1, %s8
  %s11 = scalar_select 0, %s10, %s8
  $region1: #{tpu_custom_call.1} parent=0
    #allocation4 [shape = 'u8[512]{0}', space=smem, size = 0x200, scoped, tag = 'input window, operand 0, single buffered']
    #allocation5 [shape = 's32[1]{0}', space=sflag, size = 0x4, scoped, tag = 'scoped memory for tpu_custom_call.1']
    #allocation6 [shape = 's32[1]{0}', space=sflag, size = 0x4, scoped, tag = 'scoped memory for tpu_custom_call.1']
    #allocation7 [shape = 's32[1]{0}', space=sflag, size = 0x4, scoped, tag = 'scoped memory for tpu_custom_call.1']
    #allocation8 [shape = 'u8[4096]{0}', space=vmem, size = 0x1000, scoped, tag = 'input window, operand 1, single buffered']
    #allocation9 [shape = 'u8[16384]{0}', space=vmem, size = 0x4000, scoped, tag = 'input window, operand 2, single buffered']
    #allocation10 [shape = 's32[1]{0}', space=sflag, size = 0x4, scoped, tag = 'scoped memory for tpu_custom_call.1']
    #allocation11 [shape = 'u8[16384]{0}', space=vmem, size = 0x4000, scoped, tag = 'input window, operand 5, single buffered']
    #allocation12 [shape = 'u8[512]{0}', space=vmem, size = 0x400, scoped, tag = 'output window, operand 0, single buffered']
    %12 = vsyncpa [#allocation7], 0
    %13 = vsyncpa [#allocation5], 0
    %14 = vsyncpa [#allocation10], 0
    %15 = vsyncpa [#allocation6], 0
    // Predicated region
    $region2: #{tpu_custom_call.1} parent=1 // pred_check
      _
    $region3: #{tpu_custom_call.1} parent=1 // pred_check_branch
      %17 = sbr.rel (0) target = $region5
    $region4: #{tpu_custom_call.1} parent=1 // pred_region
      %s19 = ssub.s32 16, 16
      %20 = vsyncadd [#allocation7], %s19
      %23 = dma.hbm_to_smem %s0, 16, [#allocation4], [#allocation7]
    $region5: #{tpu_custom_call.1} parent=1 // pred_fallthru
      _
    // Predicated region
    $region6: #{tpu_custom_call.1} parent=1 // pred_check
      _
    $region7: #{tpu_custom_call.1} parent=1 // pred_check_branch
      %25 = sbr.rel (0) target = $region9
    $region8: #{tpu_custom_call.1} parent=1 // pred_region
      %s27 = ssub.s32 128, 128
      %28 = vsyncadd [#allocation5], %s27
      %s29 = sshll.u32 [#allocation8], 4
      %s30 = int_to_ptr.vmem [resolvable:$true] %s29
      %35 = dma.hbm_to_vmem [thread:$0]  %s1, 128, %s30, [#allocation5], 64, 64, 4
    $region9: #{tpu_custom_call.1} parent=1 // pred_fallthru
      _
    // Predicated region
    $region10: #{tpu_custom_call.1} parent=1 // pred_check
      _
    $region11: #{tpu_custom_call.1} parent=1 // pred_check_branch
      %37 = sbr.rel (0) target = $region13
    $region12: #{tpu_custom_call.1} parent=1 // pred_region
      %s39 = ssub.s32 512, 512
      %40 = vsyncadd [#allocation10], %s39
      %s41 = sshll.u32 [#allocation9], 4
      %s42 = int_to_ptr.vmem [resolvable:$true] %s41
      %47 = dma.hbm_to_vmem [thread:$0]  %s2, 512, %s42, [#allocation10], 256, 256, 16
    $region13: #{tpu_custom_call.1} parent=1 // pred_fallthru
      _
    // Predicated region
    $region14: #{tpu_custom_call.1} parent=1 // pred_check
      _
    $region15: #{tpu_custom_call.1} parent=1 // pred_check_branch
      %49 = sbr.rel (0) target = $region17
    $region16: #{tpu_custom_call.1} parent=1 // pred_region
      _
    $region17: #{tpu_custom_call.1} parent=1 // pred_fallthru
      _
    // Predicated region
    $region18: #{tpu_custom_call.1} parent=1 // pred_check
      _
    $region19: #{tpu_custom_call.1} parent=1 // pred_check_branch
      %51 = sbr.rel (0) target = $region21
    $region20: #{tpu_custom_call.1} parent=1 // pred_region
      _
    $region21: #{tpu_custom_call.1} parent=1 // pred_fallthru
      _
    // Predicated region
    $region22: #{tpu_custom_call.1} parent=1 // pred_check
      _
    $region23: #{tpu_custom_call.1} parent=1 // pred_check_branch
      %53 = sbr.rel (0) target = $region25
    $region24: #{tpu_custom_call.1} parent=1 // pred_region
      %s55 = ssub.s32 512, 512
      %56 = vsyncadd [#allocation10], %s55
      %s57 = sshll.u32 [#allocation11], 4
      %s58 = int_to_ptr.vmem [resolvable:$true] %s57
      %63 = dma.hbm_to_vmem [thread:$0]  %s5, 512, %s58, [#allocation10], 128, 128, 8
    $region25: #{tpu_custom_call.1} parent=1 // pred_fallthru
      _
    // Predicated region
    $region26: #{tpu_custom_call.1} parent=1 // pred_check
      _
    $region27: #{tpu_custom_call.1} parent=1 // pred_check_branch
      %65 = sbr.rel (0) target = $region29
    $region28: #{tpu_custom_call.1} parent=1 // pred_region
      _
    $region29: #{tpu_custom_call.1} parent=1 // pred_fallthru
      _
    // Predicated region
    $region30: #{tpu_custom_call.1} parent=1 // pred_check
      _
    $region31: #{tpu_custom_call.1} parent=1 // pred_check_branch
      %67 = sbr.rel (0) target = $region33
    $region32: #{tpu_custom_call.1} parent=1 // pred_region
      %68 = dma.done [#allocation7], 16
    $region33: #{tpu_custom_call.1} parent=1 // pred_fallthru
      _
    // Predicated region
    $region34: #{tpu_custom_call.1} parent=1 // pred_check
      _
    $region35: #{tpu_custom_call.1} parent=1 // pred_check_branch
      %70 = sbr.rel (0) target = $region37
    $region36: #{tpu_custom_call.1} parent=1 // pred_region
      %71 = dma.done [#allocation5], 128
    $region37: #{tpu_custom_call.1} parent=1 // pred_fallthru
      _
    // Predicated region
    $region38: #{tpu_custom_call.1} parent=1 // pred_check
      _
    $region39: #{tpu_custom_call.1} parent=1 // pred_check_branch
      %73 = sbr.rel (0) target = $region41
    $region40: #{tpu_custom_call.1} parent=1 // pred_region
      %74 = dma.done [#allocation10], 512
    $region41: #{tpu_custom_call.1} parent=1 // pred_fallthru
      _
    // Predicated region
    $region42: #{tpu_custom_call.1} parent=1 // pred_check
      _
    $region43: #{tpu_custom_call.1} parent=1 // pred_check_branch
      %76 = sbr.rel (0) target = $region45
    $region44: #{tpu_custom_call.1} parent=1 // pred_region
      %77 = dma.done [#allocation10], 512
    $region45: #{tpu_custom_call.1} parent=1 // pred_fallthru
      _
    %78 = sfence
    %p80 = scmp.eq.s32.totalorder 0, 0
    // Predicated region
    $region46: #{tpu_custom_call.1} parent=1 // pred_check
      %p81 = pneg %p80
    $region47: #{tpu_custom_call.1} parent=1 // pred_check_branch
      %83 = sbr.rel (%p81) target = $region49
    $region48: #{tpu_custom_call.1} parent=1 // pred_region
      %v84 = vld [vmem:[#allocation8] sm:$0xf]
      %v85 = vld [vmem:[#allocation8 + $0x4] sm:$0xf]
      %v86 = vld [vmem:[%s3] sm:$0xf]
      %v87 = vld [vmem:[%s3 + $0x4] sm:$0xf]
      %v88 = vld [vmem:[%s4] sm:$0x1]
      %v90 = vlaneseq
      %v91 = vshrl.u32 %v90, 7
      %v92 = vsub.s32 0, %v91
      %v93 = vrot.slane %v88, %v92
      %v97 = vunpack.c.l.b16 %v84
      %v98 = vunpack.c.l.b16 %v85
      %v99 = vpack.c.b16 %v98, %v97
      %v102 = vunpack.c.l.b16 %v86
      %v103 = vunpack.c.l.b16 %v87
      %v104 = vpack.c.b16 %v103, %v102
      %vm106 = vcmask 130048
      %v108 = vsel %vm106, %v99, 0
      %110 = vmatprep.subr.bf16.mxu0 0
      %111 = vmatpush1.bf16.msra.mxu0 %v104
      %112 = vmatprep.subr.bf16.mxu0 0
      %113 = vmatpush1.bf16.msra.mxu0 0
      %114 = vmatprep.subr.bf16.mxu0 0
      %115 = vmatpush1.bf16.msra.mxu0 0
      %116 = vmatprep.subr.bf16.mxu0 0
      %117 = vmatpush1.bf16.msra.mxu0 0
      %118 = vmatprep.subr.bf16.mxu0 0
      %119 = vmatpush1.bf16.msra.mxu0 0
      %120 = vmatprep.subr.bf16.mxu0 0
      %121 = vmatpush1.bf16.msra.mxu0 0
      %122 = vmatprep.subr.bf16.mxu0 0
      %123 = vmatpush1.bf16.msra.mxu0 0
      %124 = vmatprep.subr.bf16.mxu0 0
      %125 = vmatpush1.bf16.msra.mxu0 0
      %126 = vmatprep.subr.bf16.mxu0 0
      %127 = vmatpush1.bf16.msra.mxu0 0
      %128 = vmatprep.subr.bf16.mxu0 0
      %129 = vmatpush1.bf16.msra.mxu0 0
      %130 = vmatprep.subr.bf16.mxu0 0
      %131 = vmatpush1.bf16.msra.mxu0 0
      %132 = vmatprep.subr.bf16.mxu0 0
      %133 = vmatpush1.bf16.msra.mxu0 0
      %134 = vmatprep.subr.bf16.mxu0 0
      %135 = vmatpush1.bf16.msra.mxu0 0
      %136 = vmatprep.subr.bf16.mxu0 0
      %137 = vmatpush1.bf16.msra.mxu0 0
      %138 = vmatprep.subr.bf16.mxu0 0
      %139 = vmatpush1.bf16.msra.mxu0 0
      %140 = vmatprep.subr.bf16.mxu0 0
      %141 = vmatpush1.bf16.msra.mxu0 0
      %142 = vmatprep.mubr.bf16.mxu0 0
      %143 = vmatmul.mubr.bf16.gmra.mrb[0].mxu0 %v108
      %v144 = vpop.f32.mrb[0].mxu0
      %v145 = vadd.f32 %v93, %v144
      %v146 = vpop.f32.mrb[0].mxu0
      %v147 = vpop.f32.mrb[0].mxu0
      %v148 = vadd.f32 %v93, %v147
      %v149 = vpop.f32.mrb[0].mxu0
      %150 = vdwg.mxu0
      %v151 = vmax.f32 %v145, 0.0
      %v152 = vmax.f32 %v148, 0.0
      %v153 = vpack.c.bf16 %v152, %v151
      %vm154 = vcmask 261120
      %155 = vst.msk [vmem:[#allocation2] sm:$0xff] %vm154, %v153
      %156 = vst [vmem:[#allocation3] sm:$0xff] 0.0
      %157 = vst [vmem:[#allocation3 + $0x8] sm:$0xff] 0.0
    $region49: #{tpu_custom_call.1} parent=1 // pred_fallthru
      _
    %v158 = vld [vmem:[#allocation2] sm:$0xff]
    %v159 = vld [vmem:[#allocation11] sm:$0xff]
    %v160 = vld [vmem:[#allocation11 + $0x8] sm:$0xff]
    %v161 = vld [vmem:[#allocation11 + $0x10] sm:$0xff]
    %v162 = vld [vmem:[#allocation11 + $0x18] sm:$0xff]
    %v163 = vld [vmem:[%s6] sm:$0x3]
    %v165 = vlaneseq
    %v166 = vshrl.u32 %v165, 7
    %v167 = vsub.s32 0, %v166
    %v168 = vrot.slane %v163, %v167
    %v169 = vlaneseq
    %v170 = vshrl.u32 %v169, 7
    %v171 = vsub.s32 1, %v170
    %v172 = vrot.slane %v163, %v171
    %v179 = vunpack.c.l.b16 %v159
    %v180 = vunpack.c.h.b16 %v159
    %v181 = vunpack.c.l.b16 %v160
    %v182 = vunpack.c.h.b16 %v160
    %v183 = vunpack.c.l.b16 %v161
    %v184 = vunpack.c.h.b16 %v161
    %v185 = vunpack.c.l.b16 %v162
    %v186 = vunpack.c.h.b16 %v162
    %v187 = vpack.c.b16 %v181, %v179
    %v188 = vpack.c.b16 %v182, %v180
    %v189 = vpack.c.b16 %v185, %v183
    %v190 = vpack.c.b16 %v186, %v184
    %vm195 = vcmask 261120
    %v197 = vsel %vm195, %v158, 0
    %199 = vmatprep.subr.bf16.mxu0 %v188
    %200 = vmatpush1.bf16.msra.mxu0 %v187
    %201 = vmatprep.subr.bf16.mxu0 %v190
    %202 = vmatpush1.bf16.msra.mxu0 %v189
    %203 = vmatprep.subr.bf16.mxu0 0
    %204 = vmatpush1.bf16.msra.mxu0 0
    %205 = vmatprep.subr.bf16.mxu0 0
    %206 = vmatpush1.bf16.msra.mxu0 0
    %207 = vmatprep.subr.bf16.mxu0 0
    %208 = vmatpush1.bf16.msra.mxu0 0
    %209 = vmatprep.subr.bf16.mxu0 0
    %210 = vmatpush1.bf16.msra.mxu0 0
    %211 = vmatprep.subr.bf16.mxu0 0
    %212 = vmatpush1.bf16.msra.mxu0 0
    %213 = vmatprep.subr.bf16.mxu0 0
    %214 = vmatpush1.bf16.msra.mxu0 0
    %215 = vmatprep.subr.bf16.mxu0 0
    %216 = vmatpush1.bf16.msra.mxu0 0
    %217 = vmatprep.subr.bf16.mxu0 0
    %218 = vmatpush1.bf16.msra.mxu0 0
    %219 = vmatprep.subr.bf16.mxu0 0
    %220 = vmatpush1.bf16.msra.mxu0 0
    %221 = vmatprep.subr.bf16.mxu0 0
    %222 = vmatpush1.bf16.msra.mxu0 0
    %223 = vmatprep.subr.bf16.mxu0 0
    %224 = vmatpush1.bf16.msra.mxu0 0
    %225 = vmatprep.subr.bf16.mxu0 0
    %226 = vmatpush1.bf16.msra.mxu0 0
    %227 = vmatprep.subr.bf16.mxu0 0
    %228 = vmatpush1.bf16.msra.mxu0 0
    %229 = vmatprep.subr.bf16.mxu0 0
    %230 = vmatpush1.bf16.msra.mxu0 0
    %231 = vmatprep.mubr.bf16.mxu0 0
    %232 = vmatmul.mubr.bf16.gmra.mrb[0].mxu0 %v197
    %v233 = vpop.f32.mrb[0].mxu0
    %v234 = vadd.f32 %v168, %v233
    %v235 = vpop.f32.mrb[0].mxu0
    %v236 = vadd.f32 %v172, %v235
    %v237 = vpop.f32.mrb[0].mxu0
    %v238 = vadd.f32 %v168, %v237
    %v239 = vpop.f32.mrb[0].mxu0
    %v240 = vadd.f32 %v172, %v239
    %241 = vdwg.mxu0
    %v242 = vld [vmem:[#allocation9] sm:$0xff]
    %v243 = vld [vmem:[#allocation9 + $0x8] sm:$0xff]
    %v244 = vld [vmem:[#allocation9 + $0x10] sm:$0xff]
    %v245 = vld [vmem:[#allocation9 + $0x18] sm:$0xff]
    %v246 = vsub.f32 %v242, %v234
    %v247 = vsub.f32 %v243, %v236
    %v248 = vsub.f32 %v244, %v238
    %v249 = vsub.f32 %v245, %v240
    %v250 = vmul.f32 %v246, %v246
    %v251 = vmul.f32 %v247, %v247
    %v252 = vmul.f32 %v248, %v248
    %v253 = vmul.f32 %v249, %v249
    %v254 = vld [vmem:[#allocation3] sm:$0xff]
    %v255 = vld [vmem:[#allocation3 + $0x8] sm:$0xff]
    %v256 = vadd.f32 %v254, %v250
    %v257 = vadd.f32 %v255, %v252
    %v258 = vadd.f32 %v256, %v251
    %v259 = vadd.f32 %v257, %v253
    %260 = vst [vmem:[#allocation3] sm:$0xff] %v258
    %261 = vst [vmem:[#allocation3 + $0x8] sm:$0xff] %v259
    // Predicated region
    $region50: #{tpu_custom_call.1} parent=1 // pred_check
      %p262 = pneg %p80
    $region51: #{tpu_custom_call.1} parent=1 // pred_check_branch
      %264 = sbr.rel (%p262) target = $region53
    $region52: #{tpu_custom_call.1} parent=1 // pred_region
      %v265 = vld [vmem:[#allocation3] sm:$0xff]
      %v266 = vld [vmem:[#allocation3 + $0x8] sm:$0xff]
      %267 = vadd.xlane.f32.xlu0 %v265
      %v268 = vpop.xlane.xlu0 %267
      %269 = vadd.xlane.f32.xlu0 %v266
      %v270 = vpop.xlane.xlu0 %269
      %s271 = sld [smem:[#allocation4]]
      %s272 = sld [smem:[#allocation4 + $0x1]]
      %v273 = vstv %s272
      %v274 = vmul.f32 %v273, %v268
      %v275 = vmul.f32 %v273, %v270
      %v276 = vstv %s271
      %v277 = vadd.f32 %v276, %v274
      %v278 = vadd.f32 %v276, %v275
      %v279 = vlaneseq
      %v280 = vshrl.u32 %v279, 7
      %v281 = vadd.s32 %v280, 8
      %v282 = vlaneseq
      %v283 = vand.u32 %v282, 127
      %vm284 = vcmp.eq.s32.totalorder %v280, %v283
      %vm285 = vcmp.eq.s32.totalorder %v281, %v283
      %v286 = vsel %vm284, 1, 0
      %v287 = vsel %vm285, 1, 0
      %v288 = vcvt.s32.f32 %v286
      %v289 = vcvt.s32.f32 %v287
      %v290 = vmul.f32 %v277, %v288
      %v291 = vmul.f32 %v278, %v289
      %vm292 = vcmask 130048
      %v294 = vsel %vm292, 1.0, 0
      %296 = vmatprep.subr.mxu0 0.0
      %297 = vmatpush1.msra.mxu0 %v290
      %298 = vmatprep.subr.mxu0 0.0
      %299 = vmatpush1.msra.mxu0 %v291
      %300 = vmatprep.subr.mxu0 0.0
      %301 = vmatpush1.msra.mxu0 0.0
      %302 = vmatprep.subr.mxu0 0.0
      %303 = vmatpush1.msra.mxu0 0.0
      %304 = vmatprep.subr.mxu0 0.0
      %305 = vmatpush1.msra.mxu0 0.0
      %306 = vmatprep.subr.mxu0 0.0
      %307 = vmatpush1.msra.mxu0 0.0
      %308 = vmatprep.subr.mxu0 0.0
      %309 = vmatpush1.msra.mxu0 0.0
      %310 = vmatprep.subr.mxu0 0.0
      %311 = vmatpush1.msra.mxu0 0.0
      %312 = vmatprep.subr.mxu0 0.0
      %313 = vmatpush1.msra.mxu0 0.0
      %314 = vmatprep.subr.mxu0 0.0
      %315 = vmatpush1.msra.mxu0 0.0
      %316 = vmatprep.subr.mxu0 0.0
      %317 = vmatpush1.msra.mxu0 0.0
      %318 = vmatprep.subr.mxu0 0.0
      %319 = vmatpush1.msra.mxu0 0.0
      %320 = vmatprep.subr.mxu0 0.0
      %321 = vmatpush1.msra.mxu0 0.0
      %322 = vmatprep.subr.mxu0 0.0
      %323 = vmatpush1.msra.mxu0 0.0
      %324 = vmatprep.subr.mxu0 0.0
      %325 = vmatpush1.msra.mxu0 0.0
      %326 = vmatprep.subr.mxu0 0.0
      %327 = vmatpush1.msra.mxu0 0.0
      %328 = vmatprep.subr.mxu0 0.0
      %329 = vmatpush1.msra.mxu0 0.0
      %330 = vmatprep.subr.mxu0 0.0
      %331 = vmatpush1.msra.mxu0 0.0
      %332 = vmatprep.subr.mxu0 0.0
      %333 = vmatpush1.msra.mxu0 0.0
      %334 = vmatprep.subr.mxu0 0.0
      %335 = vmatpush1.msra.mxu0 0.0
      %336 = vmatprep.subr.mxu0 0.0
      %337 = vmatpush1.msra.mxu0 0.0
      %338 = vmatprep.subr.mxu0 0.0
      %339 = vmatpush1.msra.mxu0 0.0
      %340 = vmatprep.subr.mxu0 0.0
      %341 = vmatpush1.msra.mxu0 0.0
      %342 = vmatprep.subr.mxu0 0.0
      %343 = vmatpush1.msra.mxu0 0.0
      %344 = vmatprep.subr.mxu0 0.0
      %345 = vmatpush1.msra.mxu0 0.0
      %346 = vmatprep.subr.mxu0 0.0
      %347 = vmatpush1.msra.mxu0 0.0
      %348 = vmatprep.subr.mxu0 0.0
      %349 = vmatpush1.msra.mxu0 0.0
      %350 = vmatprep.subr.mxu0 0.0
      %351 = vmatpush1.msra.mxu0 0.0
      %352 = vmatprep.subr.mxu0 0.0
      %353 = vmatpush1.msra.mxu0 0.0
      %354 = vmatprep.subr.mxu0 0.0
      %355 = vmatpush1.msra.mxu0 0.0
      %356 = vmatprep.subr.mxu0 0.0
      %357 = vmatpush1.msra.mxu0 0.0
      %358 = vmatprep.subr.mxu0 0.0
      %359 = vmatpush1.msra.mxu0 0.0
      %360 = vmatprep.mubr.f32.mxu0 0.0
      %361 = vmatmul.mubr.f32.gmra.mrb[0].mxu0 %v294
      %v362 = vpop.f32.mrb[0].mxu0
      %v363 = vadd.f32 0.0, %v362
      %v364 = vpop.f32.mrb[0].mxu0
      %365 = vdwg.mxu0
      %vm366 = vcmask 122880
      %367 = vst.msk [vmem:[#allocation12] sm:$0x1] %vm366, %v363
    $region53: #{tpu_custom_call.1} parent=1 // pred_fallthru
      _
    // Predicated region
    $region54: #{tpu_custom_call.1} parent=1 // pred_check
      _
    $region55: #{tpu_custom_call.1} parent=1 // pred_check_branch
      %369 = sbr.rel (0) target = $region57
    $region56: #{tpu_custom_call.1} parent=1 // pred_region
      %s371 = ssub.s32 16, 16
      %372 = vsyncadd [#allocation6], %s371
      %s374 = sshll.u32 [#allocation12], 4
      %s375 = int_to_ptr.vmem [resolvable:$true] %s374
      %377 = dma.vmem_to_hbm [thread:$0]  %s375, 16, %s7, [#allocation6]
    $region57: #{tpu_custom_call.1} parent=1 // pred_fallthru
      _
    // Predicated region
    $region58: #{tpu_custom_call.1} parent=1 // pred_check
      _
    $region59: #{tpu_custom_call.1} parent=1 // pred_check_branch
      %379 = sbr.rel (0) target = $region61
    $region60: #{tpu_custom_call.1} parent=1 // pred_region
      %380 = dma.done [#allocation6], 16
    $region61: #{tpu_custom_call.1} parent=1 // pred_fallthru
      _
    %381 = vsyncpa [#allocation5], 1
    %382 = vsyncpa [#allocation10], 1
    %383 = vsyncpa [#allocation6], 1
    %384 = vsyncpa [#allocation7], 1

</llo_original>
